<compile_context>
chip_gen: v6e
topology: v6e:2x2x1
jax: 0.10.0
libtpu: 0.0.40
codegen_flags: <defaults>
</compile_context>

<pallas_src>
import jax
import jax.numpy as jnp
from jax.experimental import pallas as pl
from jax.experimental.pallas import tpu as pltpu


# Tunables (kept at exact-numerics defaults so the 1e-4 check below passes).
#  - MXU_DTYPE = jnp.bfloat16 on v6e/v7x feeds the MXU its fast bf16 path (~2-4x on
#    the dominant P_x @ cost matmul); relax the test tolerance to ~1e-3 first.
#  - APPROX_RECIP = True uses the EUP vrcp fast path for the softmax row-sum
#    normalization; also needs a looser tolerance.
MXU_DTYPE = jnp.float32
APPROX_RECIP = False


def _round_up(x, m):
    return ((x + m - 1) // m) * m


def _pick_slice_chunk(L, N, M, budget_bytes=12 << 20):
    """Slice-chunk size for the distance kernel: diff/ex (2*N*N), pc (N*M) and the
    double-buffered P_r chunk (2*M*M) per slice must fit a portable VMEM budget
    (v7x: 64 MiB physical / 32 MiB scoped default)."""
    per_slice = 4 * (2 * N * N + N * M + 2 * M * M + 6 * N + 2 * 128)
    cl = max(1, budget_bytes // per_slice)
    if cl >= L:
        return int(L), 1
    cl = max(8, (cl // 8) * 8)          # sublane-aligned whenever it does not cover L
    n_chunks = -(-L // cl)
    return int(cl), int(n_chunks)


# ---------------------------------------------------------------------------
# Kernel 1: fused slice projection  (R, d) @ (d, Lp) -> (R, Lp), lane-dense output
# ---------------------------------------------------------------------------
def _proj_kernel(x_ref, w_ref, o_ref):
    o_ref[...] = jnp.dot(x_ref[...].astype(MXU_DTYPE), w_ref[...].astype(MXU_DTYPE),
                         preferred_element_type=jnp.float32)


def slice_project(rows, Wt):
    """rows: (R, d), Wt: (d, L). Returns (R, L). L padded to 128 lanes internally."""
    R, d = rows.shape
    L = Wt.shape[1]
    Lp = _round_up(L, 128)                        # lane-dense output
    tile_r = 512 if R > 512 else _round_up(R, 8)  # single step at demo sizes
    Rp = _round_up(R, tile_r)
    rows_p = jnp.pad(rows, ((0, Rp - R), (0, 0))) if Rp != R else rows
    w_p = jnp.pad(Wt, ((0, 0), (0, Lp - L))) if Lp != L else Wt
    out = pl.pallas_call(
        _proj_kernel,
        out_shape=jax.ShapeDtypeStruct((Rp, Lp), jnp.float32),
        grid=(Rp // tile_r,),
        in_specs=[pl.BlockSpec((tile_r, d), lambda i: (i, 0)),
                  pl.BlockSpec((d, Lp), lambda i: (0, 0))],
        out_specs=pl.BlockSpec((tile_r, Lp), lambda i: (i, 0)),
        compiler_params=pltpu.CompilerParams(dimension_semantics=("parallel",)),
    )(rows_p, w_p)
    return out[:R, :L]


# ---------------------------------------------------------------------------
# Kernel 2: batch-invariant reference SoftSort_p2 plan  P_r  (Lc, M, M),
#           computed ONCE, chunked over slices. Rows are in ASCENDING-rank order
#           (consistent with kernel 3; see header note).
# ---------------------------------------------------------------------------
def _make_ref_plan_kernel(tau):
    inv_tau = 1.0 / float(tau)

    def kernel(rs_ref, rsa_ref, o_ref):
        rs = rs_ref[...]        # (cl, M)  raw reference slice scores
        rsa = rsa_ref[...]      # (cl, M)  ascending-sorted
        diff = rs[:, None, :] - rsa[:, :, None]          # (cl, M, M)
        # row max of -(diff^2)/tau is exactly 0 (diagonal) -> no max-subtraction
        e = jnp.exp(-(diff * diff) * inv_tau)
        denom = jnp.sum(e, axis=-1, keepdims=True)       # (cl, M, 1)
        o_ref[...] = e / denom

    return kernel


def reference_softsort_plan(rs, rs_asc, tau, cl, n_chunks):
    Lc, M = rs.shape
    return pl.pallas_call(
        _make_ref_plan_kernel(tau),
        out_shape=jax.ShapeDtypeStruct((Lc, M, M), jnp.float32),
        grid=(n_chunks,),
        in_specs=[pl.BlockSpec((cl, M), lambda c: (c, 0)),
                  pl.BlockSpec((cl, M), lambda c: (c, 0))],
        out_specs=pl.BlockSpec((cl, M, M), lambda c: (c, 0, 0)),
        compiler_params=pltpu.CompilerParams(dimension_semantics=("parallel",)),
    )(rs, rs_asc)


# ---------------------------------------------------------------------------
# Kernel 3: distance head, grid = (slice-chunks, B)
#   dist_l = (1/N) * sum_i < (P_x @ cost)[i,:], P_r[i,:] >,  P_x = ex / rowsum
# ---------------------------------------------------------------------------
def _make_dist_kernel(N, M, cl, tau):
    inv_tau = 1.0 / float(tau)
    inv_n = 1.0 / float(N)

    def kernel(x_ref, rt_ref, rn_ref, xs_ref, pr_ref, o_ref):
        # ---- fused cdist(X[b], reference): (N, M) tile computed & consumed in VMEM ----
        x = x_ref[0]                                                       # (N, d)
        xr = jnp.dot(x.astype(MXU_DTYPE), rt_ref[...].astype(MXU_DTYPE),
                     preferred_element_type=jnp.float32)                   # (N, M)
        xn = jnp.sum(x * x, axis=-1, keepdims=True)                        # (N, 1)
        cost = jnp.sqrt(jnp.maximum(xn + rn_ref[...] - 2.0 * xr, 0.0))     # (N, M)

        # ---- SoftSort_p2 of this chunk of slices (rows = ascending rank) ----
        xs = xs_ref[0]                                                     # (cl, N) ascending
        diff = xs[:, None, :] - xs[:, :, None]                             # (cl, N, N)
        # row max of -(diff^2)/tau is exactly 0 (diagonal) -> no max-subtraction
        ex = jnp.exp(-(diff * diff) * inv_tau)                             # (cl, N, N)
        rowsum = jnp.sum(ex, axis=-1)                                      # (cl, N)

        # ---- transport-plan contraction ----
        pc = jnp.dot(ex.reshape(cl * N, N).astype(MXU_DTYPE), cost.astype(MXU_DTYPE),
                     preferred_element_type=jnp.float32)                   # (cl*N, M)
        contrib = jnp.sum(pc.reshape(cl, N, M) * pr_ref[...], axis=-1)     # (cl, N)
        w = contrib * pl.reciprocal(rowsum, approx=APPROX_RECIP)           # (cl, N)
        dist = jnp.sum(w, axis=-1, keepdims=True) * inv_n                  # (cl, 1)

        # lane-dense write: per-slice value broadcast across 128 lanes (unmasked vst)
        o_ref[0, 0] = jnp.broadcast_to(dist, (cl, 128))

    return kernel


def swe_distances(X, reference, xs_pad, pr, tau, cl, n_chunks):
    B, N, d = X.shape
    M = reference.shape[0]
    rt = jnp.asarray(reference.T)                                  # (d, M)  grid-invariant
    rn = jnp.sum(reference * reference, axis=1)[None, :]           # (1, M)  grid-invariant

    # explicit VMEM limit computed from the chunked working set (v7x: 64 MiB physical)
    est = 4 * (2 * (N * d + d * M + M + cl * N + cl * M * M + cl * 128)
               + 2 * cl * N * N + cl * N * M + 6 * cl * N + 2 * N * M)
    vmem_limit = int(min(max(2 * est, 16 << 20), 48 << 20))

    out = pl.pallas_call(
        _make_dist_kernel(N, M, cl, tau),
        out_shape=jax.ShapeDtypeStruct((B, n_chunks, cl, 128), jnp.float32),
        grid=(n_chunks, B),
        in_specs=[
            pl.BlockSpec((1, N, d), lambda c, b: (b, 0, 0)),       # X[b]
            pl.BlockSpec((d, M), lambda c, b: (0, 0)),             # reference^T
            pl.BlockSpec((1, M), lambda c, b: (0, 0)),             # |reference|^2
            pl.BlockSpec((1, cl, N), lambda c, b: (b, c, 0)),      # ascending slice scores
            pl.BlockSpec((cl, M, M), lambda c, b: (c, 0, 0)),      # P_r chunk (streamed)
        ],
        out_specs=pl.BlockSpec((1, 1, cl, 128), lambda c, b: (b, c, 0, 0)),
        compiler_params=pltpu.CompilerParams(
            dimension_semantics=("parallel", "parallel"),
            vmem_limit_bytes=vmem_limit),
    )(X, rt, rn, xs_pad, pr)
    return out[:, :, :, 0].reshape(B, n_chunks * cl)               # (B, Lc)


# ---------------------------------------------------------------------------
# Full forward (embedding='flatten', parallel=True)
# ---------------------------------------------------------------------------
def constrained_swe_forward(X, reference, theta_w, tau=1.0):
    B, N, d = X.shape
    M, _ = reference.shape
    L = theta_w.shape[0]
    # TODO(synk): Interp1d linear-resampling branch (M != N) not implemented; the
    # module's parallel path itself requires M == N, which the demo uses.
    assert M == N

    # --- one fused, lane-dense projection matmul for X and the reference set ---
    Wt = jnp.asarray(theta_w.T)                                    # (d, L)
    rows = jnp.concatenate([X.reshape(B * N, d), reference], axis=0)
    proj = slice_project(rows, Wt)                                 # (B*N + M, L)
    Xslices = proj[:B * N].reshape(B, N, L)
    Rslices2 = proj[B * N:]                                        # (M, L)

    # --- sort / argsort / gather index plumbing (plain JAX) ---
    Xsorted = jnp.sort(Xslices, axis=1)                            # (B, N, L) ascending
    Rind = jnp.argsort(Rslices2, axis=0)                           # (M, L)
    gathered = jnp.take_along_axis(
        Xsorted, jnp.broadcast_to(Rind[None], (B, M, L)), axis=1)
    embeddings = jnp.transpose(Rslices2[None] - gathered, (0, 2, 1)).reshape(B, -1)

    # --- distance-head inputs: ascending rows on both sides (no flips / desc sorts) ---
    xs = jnp.transpose(Xsorted, (0, 2, 1))                         # (B, L, N) rows ascending
    rs = Rslices2.T                                                # (L, M), batch-invariant
    rs_asc = jnp.sort(rs, axis=-1)                                 # sorted once, not B*L times

    cl, n_chunks = _pick_slice_chunk(L, N, M)
    Lc = cl * n_chunks
    if Lc != L:                                                    # pad slices to chunk grid
        xs = jnp.pad(xs, ((0, 0), (0, Lc - L), (0, 0)))
        rs = jnp.pad(rs, ((0, Lc - L), (0, 0)))
        rs_asc = jnp.pad(rs_asc, ((0, Lc - L), (0, 0)))

    # --- batch-invariant reference SoftSort plan, computed once and streamed ---
    pr = reference_softsort_plan(rs, rs_asc, tau, cl, n_chunks)    # (Lc, M, M)

    dists = swe_distances(X, reference, xs, pr, tau, cl, n_chunks)[:, :L]   # (B, L)
    per_slice = dists.mean(axis=0)                                  # (L,)
    return embeddings, per_slice


# ---------------------------------------------------------------------------
# Pure-JAX reference (same semantics) for a correctness sanity check.
# ---------------------------------------------------------------------------
def reference_forward(X, reference, W, tau=1.0):
    hp = jax.lax.Precision.HIGHEST
    B, N, d = X.shape
    M = reference.shape[0]
    L = W.shape[0]
    Xsl = jnp.einsum('bnd,ld->bnl', X, W, precision=hp)
    Rsl = jnp.einsum('md,ld->ml', reference, W, precision=hp)
    Xs = jnp.sort(Xsl, axis=1)
    Rind = jnp.argsort(Rsl, axis=0)
    g = jnp.take_along_axis(Xs, jnp.broadcast_to(Rind[None], (B, M, L)), axis=1)
    emb = jnp.transpose(Rsl[None] - g, (0, 2, 1)).reshape(B, -1)
    diff = X[:, :, None, :] - reference[None, None, :, :]
    cost = jnp.sqrt(jnp.sum(diff * diff, axis=-1))

    def softsort(s):
        s_sorted = jnp.flip(jnp.sort(s, axis=-1), axis=-1)
        pd = -((s[:, None, :] - s_sorted[:, :, None]) ** 2) / tau
        return jax.nn.softmax(pd, axis=-1)

    xs = jnp.transpose(Xs, (0, 2, 1)).reshape(B * L, N)
    rs = jnp.broadcast_to(Rsl.T[None], (B, L, M)).reshape(B * L, M)
    ssx = softsort(xs)
    ssr = softsort(rs)
    plans = jnp.einsum('bij,bim->bjm', ssx, ssr, precision=hp) / N
    cflat = jnp.broadcast_to(cost[:, None], (B, L, N, M)).reshape(B * L, N, M)
    dist = jnp.sum(cflat * plans, axis=(-1, -2))
    return emb, dist.reshape(B, L).mean(axis=0)


if __name__ == "__main__":
    B, N, d_in = 2, 16, 8
    M = N          # num_ref_points (parallel path requires M == N)
    L = 8          # num_projections
    tau = 1.0

    key = jax.random.PRNGKey(0)
    kx, kv = jax.random.split(key)
    X = jax.random.normal(kx, (B, N, d_in), dtype=jnp.float32)

    # Deterministic parameter init mirroring __init__:
    #   reference = linspace(-1, 1, M) repeated over d_in columns
    #   theta     = weight_norm(Linear(d_in, L, bias=False), dim=0),
    #               weight_v ~ N(0,1), weight_g = 1  => rows of v L2-normalized
    reference = jnp.tile(jnp.linspace(-1.0, 1.0, M)[:, None], (1, d_in)).astype(jnp.float32)
    v = jax.random.normal(kv, (L, d_in), dtype=jnp.float32)
    theta_w = v / jnp.linalg.norm(v, axis=1, keepdims=True)
    # self.weight (L, M) is initialized in __init__ but never used in forward; omitted.

    emb, dists = constrained_swe_forward(X, reference, theta_w, tau)
    emb = jax.block_until_ready(emb)
    dists = jax.block_until_ready(dists)

    emb_ref, dists_ref = reference_forward(X, reference, theta_w, tau)
    assert emb.shape == (B, L * M) and dists.shape == (L,)
    assert jnp.allclose(emb, emb_ref, atol=1e-4, rtol=1e-4)
    assert jnp.allclose(dists, dists_ref, atol=1e-4, rtol=1e-4)
    print("KERNEL_OK")
</pallas_src>

<mosaic_0001>
module attributes {stable_mosaic.version = 11 : i64} {
  func.func @_proj_kernel(%arg0: i32, %arg1: memref<48x8xf32, #tpu.memory_space<vmem>>, %arg2: memref<8x128xf32, #tpu.memory_space<vmem>>, %arg3: memref<48x128xf32, #tpu.memory_space<vmem>>) attributes {dimension_semantics = [#tpu.dimension_semantics<parallel>], iteration_bounds = array<i64: 1>, scalar_prefetch = 0 : i64, scratch_operands = 0 : i64, tpu.core_type = #tpu.core_type<tc>, window_params = [{transform_indices = @transform_0, window_bounds = array<i64: 48, 8>}, {pipeline_mode = #tpu.pipeline_mode<synchronous>, transform_indices = @transform_1, window_bounds = array<i64: 8, 128>}, {transform_indices = @transform_2, window_bounds = array<i64: 48, 128>}]} {
    %c0 = arith.constant 0 : index
    %c0_0 = arith.constant 0 : index
    %0 = vector.load %arg1[%c0, %c0_0] : memref<48x8xf32, #tpu.memory_space<vmem>>, vector<48x8xf32>
    %c0_1 = arith.constant 0 : index
    %c0_2 = arith.constant 0 : index
    %1 = vector.load %arg2[%c0_1, %c0_2] : memref<8x128xf32, #tpu.memory_space<vmem>>, vector<8x128xf32>
    %cst = arith.constant dense<0.000000e+00> : vector<48x128xf32>
    %2 = tpu.matmul %0, %1, %cst {dimension_numbers = #tpu.dot_dimension_numbers<[1], [0], [0], [1], [0, 0, 1, 1], [], []>} : vector<48x8xf32>, vector<8x128xf32>, vector<48x128xf32> -> vector<48x128xf32>
    %c0_3 = arith.constant 0 : index
    %c0_4 = arith.constant 0 : index
    %3 = vector.load %arg3[%c0_3, %c0_4] : memref<48x128xf32, #tpu.memory_space<vmem>>, vector<48x128xf32>
    tpu.vector_store %arg3[%c0_3, %c0_4], %2 {strides = array<i32>} : memref<48x128xf32, #tpu.memory_space<vmem>>, vector<48x128xf32>,
    return
  }
  func.func @transform_0(%arg0: i32) -> (i32, i32) {
    %c0_i32 = arith.constant 0 : i32
    %c0_i32_0 = arith.constant 0 : i32
    return %arg0, %c0_i32 : i32, i32
  }
  func.func @transform_1(%arg0: i32) -> (i32, i32) {
    %c0_i32 = arith.constant 0 : i32
    %c0_i32_0 = arith.constant 0 : i32
    %c0_i32_1 = arith.constant 0 : i32
    return %c0_i32, %c0_i32_0 : i32, i32
  }
  func.func @transform_2(%arg0: i32) -> (i32, i32) {
    %c0_i32 = arith.constant 0 : i32
    %c0_i32_0 = arith.constant 0 : i32
    return %arg0, %c0_i32 : i32, i32
  }
}

</mosaic_0001>

<llo_original>
// kernel: tpu_custom_call.1
$region0: #{tpu_custom_call.1}
  #allocation0 [shape = 'u32[]', space=smem, size = 0x4, offset = 0x4, fixed_abs, tag = 'smem constant byte address 0x4 - core index']
  #allocation1 [shape = 'u32[144,128]{1,0:T(1,128)}', space=vmem, size = 0x12000, scoped, tag = 'internal scratch']
  %s0 = inlined_call_operand.vmem [shape: f32[48,8], index: 0, kind: input, shape index: {}]
  %s1 = inlined_call_operand.vmem [shape: f32[8,128], index: 1, kind: input, shape index: {}]
  %s2 = inlined_call_operand.hbm [shape: f32[48,128], index: 2, kind: output, shape index: {}]
  %s3 = sld [smem:[#allocation0]]
  $region18: #{tpu_custom_call.1} parent=0
    _
  %s5 = ssub.s32 1, %s3
  %s6 = scalar_select 0, %s5, %s3
  $region1: #{tpu_custom_call.1} parent=0
    #allocation2 [shape = 'u8[24576]{0}', space=vmem, size = 0x6000, scoped, tag = 'output window, operand 0, single buffered']
    #allocation3 [shape = 's32[1]{0}', space=sflag, size = 0x4, scoped, tag = 'scoped memory for tpu_custom_call.1']
    %7 = vsyncpa [#allocation3], 0
    // Predicated region
    $region2: #{tpu_custom_call.1} parent=1 // pred_check
      _
    $region3: #{tpu_custom_call.1} parent=1 // pred_check_branch
      %9 = sbr.rel (0) target = $region5
    $region4: #{tpu_custom_call.1} parent=1 // pred_region
      _
    $region5: #{tpu_custom_call.1} parent=1 // pred_fallthru
      _
    // Predicated region
    $region6: #{tpu_custom_call.1} parent=1 // pred_check
      _
    $region7: #{tpu_custom_call.1} parent=1 // pred_check_branch
      %11 = sbr.rel (0) target = $region9
    $region8: #{tpu_custom_call.1} parent=1 // pred_region
      _
    $region9: #{tpu_custom_call.1} parent=1 // pred_fallthru
      _
    %v12 = vld [vmem:[%s0] sm:$0xff]
    %v13 = vld [vmem:[%s0 + $0x8] sm:$0xff]
    %v14 = vld [vmem:[%s0 + $0x10] sm:$0xff]
    %v15 = vld [vmem:[%s0 + $0x18] sm:$0xff]
    %v16 = vld [vmem:[%s0 + $0x20] sm:$0xff]
    %v17 = vld [vmem:[%s0 + $0x28] sm:$0xff]
    %v18 = vld [vmem:[%s1] sm:$0xff]
    %vm19 = vcmask 64512
    %v21 = vsel %vm19, %v12, 0
    %v24 = vsel %vm19, %v13, 0
    %v27 = vsel %vm19, %v14, 0
    %v30 = vsel %vm19, %v15, 0
    %v33 = vsel %vm19, %v16, 0
    %v36 = vsel %vm19, %v17, 0
    %38 = vmatprep.subr.mxu0 0.0
    %39 = vmatpush1.msra.mxu0 0.0
    %40 = vmatprep.subr.mxu0 0.0
    %41 = vmatpush1.msra.mxu0 0.0
    %42 = vmatprep.subr.mxu0 0.0
    %43 = vmatpush1.msra.mxu0 0.0
    %44 = vmatprep.subr.mxu0 0.0
    %45 = vmatpush1.msra.mxu0 0.0
    %46 = vmatprep.subr.mxu0 0.0
    %47 = vmatpush1.msra.mxu0 0.0
    %48 = vmatprep.subr.mxu0 0.0
    %49 = vmatpush1.msra.mxu0 0.0
    %50 = vmatprep.subr.mxu0 0.0
    %51 = vmatpush1.msra.mxu0 0.0
    %52 = vmatprep.subr.mxu0 0.0
    %53 = vmatpush1.msra.mxu0 0.0
    %54 = vmatprep.subr.mxu0 0.0
    %55 = vmatpush1.msra.mxu0 0.0
    %56 = vmatprep.subr.mxu0 0.0
    %57 = vmatpush1.msra.mxu0 0.0
    %58 = vmatprep.subr.mxu0 0.0
    %59 = vmatpush1.msra.mxu0 0.0
    %60 = vmatprep.subr.mxu0 0.0
    %61 = vmatpush1.msra.mxu0 0.0
    %62 = vmatprep.subr.mxu0 0.0
    %63 = vmatpush1.msra.mxu0 0.0
    %64 = vmatprep.subr.mxu0 0.0
    %65 = vmatpush1.msra.mxu0 0.0
    %66 = vmatprep.subr.mxu0 0.0
    %67 = vmatpush1.msra.mxu0 0.0
    %68 = vmatprep.subr.mxu0 0.0
    %69 = vmatpush1.msra.mxu0 %v18
    %70 = vmatprep.subr.mxu0 0.0
    %71 = vmatpush2.msra.mxu0 0.0
    %72 = vmatprep.subr.mxu0 0.0
    %73 = vmatpush2.msra.mxu0 0.0
    %74 = vmatprep.subr.mxu0 0.0
    %75 = vmatpush2.msra.mxu0 0.0
    %76 = vmatprep.subr.mxu0 0.0
    %77 = vmatpush2.msra.mxu0 0.0
    %78 = vmatprep.subr.mxu0 0.0
    %79 = vmatpush2.msra.mxu0 0.0
    %80 = vmatprep.subr.mxu0 0.0
    %81 = vmatpush2.msra.mxu0 0.0
    %82 = vmatprep.subr.mxu0 0.0
    %83 = vmatpush2.msra.mxu0 0.0
    %84 = vmatprep.subr.mxu0 0.0
    %85 = vmatpush2.msra.mxu0 0.0
    %86 = vmatprep.subr.mxu0 0.0
    %87 = vmatpush2.msra.mxu0 0.0
    %88 = vmatprep.subr.mxu0 0.0
    %89 = vmatpush2.msra.mxu0 0.0
    %90 = vmatprep.subr.mxu0 0.0
    %91 = vmatpush2.msra.mxu0 0.0
    %92 = vmatprep.subr.mxu0 0.0
    %93 = vmatpush2.msra.mxu0 0.0
    %94 = vmatprep.subr.mxu0 0.0
    %95 = vmatpush2.msra.mxu0 0.0
    %96 = vmatprep.subr.mxu0 0.0
    %97 = vmatpush2.msra.mxu0 0.0
    %98 = vmatprep.subr.mxu0 0.0
    %99 = vmatpush2.msra.mxu0 0.0
    %100 = vmatprep.subr.mxu0 0.0
    %101 = vmatpush2.msra.mxu0 0.0
    %102 = vmatprep.mubr.f32.mxu0 0.0
    %103 = vmatmul.mubr.f32.gmra.mxu0 %v21
    %v104 = vpop.f32.mrf.mxu0
    %v105 = vadd.f32 0.0, %v104
    %v106 = vpop.f32.mrf.mxu0
    %107 = vmatprep.mubr.f32.mxu0 0.0
    %108 = vmatmul.mubr.f32.gmra.mxu0 %v24
    %v109 = vpop.f32.mrf.mxu0
    %v110 = vadd.f32 0.0, %v109
    %v111 = vpop.f32.mrf.mxu0
    %112 = vmatprep.mubr.f32.mxu0 0.0
    %113 = vmatmul.mubr.f32.gmra.mxu0 %v27
    %v114 = vpop.f32.mrf.mxu0
    %v115 = vadd.f32 0.0, %v114
    %v116 = vpop.f32.mrf.mxu0
    %117 = vmatprep.mubr.f32.mxu0 0.0
    %118 = vmatmul.mubr.f32.gmra.mxu0 %v30
    %v119 = vpop.f32.mrf.mxu0
    %v120 = vadd.f32 0.0, %v119
    %v121 = vpop.f32.mrf.mxu0
    %122 = vmatprep.mubr.f32.mxu0 0.0
    %123 = vmatmul.mubr.f32.gmra.mxu0 %v33
    %v124 = vpop.f32.mrf.mxu0
    %v125 = vadd.f32 0.0, %v124
    %v126 = vpop.f32.mrf.mxu0
    %127 = vmatprep.mubr.f32.mxu0 0.0
    %128 = vmatmul.mubr.f32.gmra.mxu0 %v36
    %v129 = vpop.f32.mrf.mxu0
    %v130 = vadd.f32 0.0, %v129
    %v131 = vpop.f32.mrf.mxu0
    %132 = vdwg.mxu0
    %133 = vst [vmem:[#allocation2] sm:$0xff] %v105
    %134 = vst [vmem:[#allocation2 + $0x8] sm:$0xff] %v110
    %135 = vst [vmem:[#allocation2 + $0x10] sm:$0xff] %v115
    %136 = vst [vmem:[#allocation2 + $0x18] sm:$0xff] %v120
    %137 = vst [vmem:[#allocation2 + $0x20] sm:$0xff] %v125
    %138 = vst [vmem:[#allocation2 + $0x28] sm:$0xff] %v130
    // Predicated region
    $region10: #{tpu_custom_call.1} parent=1 // pred_check
      _
    $region11: #{tpu_custom_call.1} parent=1 // pred_check_branch
      %140 = sbr.rel (0) target = $region13
    $region12: #{tpu_custom_call.1} parent=1 // pred_region
      %s142 = ssub.s32 768, 768
      %143 = vsyncadd [#allocation3], %s142
      %s144 = sshll.u32 [#allocation2], 4
      %s145 = int_to_ptr.vmem [resolvable:$true] %s144
      %150 = dma.vmem_to_hbm [thread:$0]  %s145, 768, %s2, [#allocation3], 128, 128, 8
    $region13: #{tpu_custom_call.1} parent=1 // pred_fallthru
      _
    // Predicated region
    $region14: #{tpu_custom_call.1} parent=1 // pred_check
      _
    $region15: #{tpu_custom_call.1} parent=1 // pred_check_branch
      %152 = sbr.rel (0) target = $region17
    $region16: #{tpu_custom_call.1} parent=1 // pred_region
      %153 = dma.done [#allocation3], 768
    $region17: #{tpu_custom_call.1} parent=1 // pred_fallthru
      _
    %154 = vsyncpa [#allocation3], 1

</llo_original>
